<compile_context>
chip_gen: v6e
topology: v6e:2x2x1
jax: 0.10.0
libtpu: 0.0.40
codegen_flags: <defaults>
</compile_context>

<pallas_src>
import jax
import jax.numpy as jnp
from jax.experimental import pallas as pl
from jax.experimental.pallas import tpu as pltpu


def _round_up(n, m):
    return ((n + m - 1) // m) * m


def _cdiv(a, b):
    return (a + b - 1) // b


def mlp_kernel(x_ref, w1_ref, b1_ref, w2_ref, b2_ref, w3_ref, b3_ref, o_ref):
    # x_ref: (F, TM) feature-major tile; weights are PyTorch (out, in) layout.
    # Layer 1: (H1, F) @ (F, TM) -> (H1, TM), bias + ReLU (lane-dense on VPU)
    h = jnp.dot(w1_ref[...], x_ref[...], preferred_element_type=jnp.float32)
    h = jnp.maximum(h + b1_ref[...], 0.0)

    # Layer 2: (H2, H1) @ (H1, TM) -> (H2, TM)
    h = jnp.dot(w2_ref[...], h, preferred_element_type=jnp.float32)
    h = jnp.maximum(h + b2_ref[...], 0.0)

    # Layer 3: (1, H2) @ (H2, TM) -> (1, TM)  regression head, no activation.
    out = jnp.dot(w3_ref[...], h, preferred_element_type=jnp.float32) + b3_ref[...]
    o_ref[...] = out.astype(o_ref.dtype)   # unmasked, lane-dense store


def insurance_price_nn(x, w1, b1, w2, b2, w3, b3, *, block_b=2048):
    """x: (B, 10) f32.
    Weights in PyTorch nn.Linear layout:
      w1: (h0, 10), b1: (h0,), w2: (h1, h0), b2: (h1,), w3: (1, h1), b3: (1,)
    Returns (B, 1) f32, matching the module's forward."""
    B, F = x.shape
    H1 = w1.shape[0]
    H2 = w2.shape[0]
    C = w3.shape[0]

    # Batch tile on the lane axis: multiple of 128 lanes, clamped to batch.
    B_lane = _round_up(B, 128)
    TM = min(_round_up(block_b, 128), B_lane)
    # v7x: keep at least 2 grid steps (2 TensorCores) when the batch allows it.
    if B_lane // TM < 2 and B_lane >= 256:
        TM = _round_up(_cdiv(B_lane, 2), 128)
    B_pad = _round_up(B, TM)
    n_blocks = B_pad // TM

    # Feature-major input: (F, B_pad); padded rows are zero and sliced off later.
    xt = jnp.pad(x, ((0, B_pad - B), (0, 0))).T

    b1_2d = b1.reshape(H1, 1)
    b2_2d = b2.reshape(H2, 1)
    b3_2d = b3.reshape(C, 1)

    # VMEM budget: double-buffered x/out tiles + resident weights + live
    # activations (+ headroom).  Stays small in the feature-major layout.
    def _tile_bytes(r, c):
        return _round_up(max(r, 1), 8) * _round_up(max(c, 1), 128) * 4

    vmem_budget = (
        2 * _tile_bytes(F, TM)                       # x tile (double-buffered)
        + 2 * _tile_bytes(C, TM)                     # out tile (double-buffered)
        + 2 * (_tile_bytes(H1, F) + _tile_bytes(H1, 1)
               + _tile_bytes(H2, H1) + _tile_bytes(H2, 1)
               + _tile_bytes(C, H2) + _tile_bytes(C, 1))
        + _tile_bytes(H1, TM) + _tile_bytes(H2, TM)  # activations
        + (4 << 20)                                  # headroom
    )
    vmem_limit = int(min(max(vmem_budget, 8 << 20), 32 << 20))

    flops = 2 * B_pad * (F * H1 + H1 * H2 + H2 * C)
    bytes_accessed = 4 * (
        B_pad * F + H1 * F + H1 + H2 * H1 + H2 + C * H2 + C + B_pad * C
    )

    out = pl.pallas_call(
        mlp_kernel,
        out_shape=jax.ShapeDtypeStruct((C, B_pad), jnp.float32),
        grid=(n_blocks,),
        in_specs=[
            pl.BlockSpec((F, TM), lambda i: (0, i)),    # x: tiled along lanes
            pl.BlockSpec((H1, F), lambda i: (0, 0)),    # weights/biases stay
            pl.BlockSpec((H1, 1), lambda i: (0, 0)),    # VMEM-resident across
            pl.BlockSpec((H2, H1), lambda i: (0, 0)),   # the whole grid
            pl.BlockSpec((H2, 1), lambda i: (0, 0)),
            pl.BlockSpec((C, H2), lambda i: (0, 0)),
            pl.BlockSpec((C, 1), lambda i: (0, 0)),
        ],
        out_specs=pl.BlockSpec((C, TM), lambda i: (0, i)),  # lane-dense output
        compiler_params=pltpu.CompilerParams(
            dimension_semantics=("parallel",),          # shard across TCs (v7x)
            vmem_limit_bytes=vmem_limit,
        ),
        cost_estimate=pl.CostEstimate(
            flops=flops, transcendentals=0, bytes_accessed=bytes_accessed
        ),
    )(xt, w1, b1_2d, w2, b2_2d, w3, b3_2d)

    # (C, B_pad) -> (B, 1)
    return out[:, :B].T


def reference(x, w1, b1, w2, b2, w3, b3):
    h = jnp.maximum(x @ w1.T + b1, 0.0)
    h = jnp.maximum(h @ w2.T + b2, 0.0)
    return h @ w3.T + b3


if __name__ == "__main__":
    key = jax.random.PRNGKey(0)
    ks = jax.random.split(key, 7)

    B = 200               # not a multiple of 128 -> exercises padding path
    INPUT_SIZE = 10       # fixed by the module (nn.Linear(10, ...))
    H1, H2 = 64, 32       # hidden_sizes

    x = jax.random.normal(ks[0], (B, INPUT_SIZE), dtype=jnp.float32)

    # PyTorch nn.Linear-style init, native (out, in) weight layout.
    def linear_params(kw, kb, fan_in, fan_out):
        bound = 1.0 / (fan_in ** 0.5)
        w = jax.random.uniform(kw, (fan_out, fan_in), jnp.float32, -bound, bound)
        b = jax.random.uniform(kb, (fan_out,), jnp.float32, -bound, bound)
        return w, b

    w1, b1 = linear_params(ks[1], ks[2], INPUT_SIZE, H1)
    w2, b2 = linear_params(ks[3], ks[4], H1, H2)
    w3, b3 = linear_params(ks[5], ks[6], H2, 1)

    # Default block_b: the clamp logic yields TM=128 and a 2-step grid here,
    # exercising the multi-block / padding / 2-TensorCore path.
    out = insurance_price_nn(x, w1, b1, w2, b2, w3, b3)
    out = jax.block_until_ready(out)

    ref = reference(x, w1, b1, w2, b2, w3, b3)
    assert out.shape == (B, 1)
    assert jnp.allclose(out, ref, atol=1e-5, rtol=1e-5)

    print("KERNEL_OK")
</pallas_src>

<mosaic_0001>
module attributes {stable_mosaic.version = 11 : i64} {
  func.func @mlp_kernel(%arg0: i32, %arg1: memref<10x128xf32, #tpu.memory_space<vmem>>, %arg2: memref<64x10xf32, #tpu.memory_space<vmem>>, %arg3: memref<64x1xf32, #tpu.memory_space<vmem>>, %arg4: memref<32x64xf32, #tpu.memory_space<vmem>>, %arg5: memref<32x1xf32, #tpu.memory_space<vmem>>, %arg6: memref<1x32xf32, #tpu.memory_space<vmem>>, %arg7: memref<1x1xf32, #tpu.memory_space<vmem>>, %arg8: memref<1x128xf32, #tpu.memory_space<vmem>>) attributes {dimension_semantics = [#tpu.dimension_semantics<parallel>], iteration_bounds = array<i64: 2>, scalar_prefetch = 0 : i64, scratch_operands = 0 : i64, tpu.core_type = #tpu.core_type<tc>, window_params = [{transform_indices = @transform_0, window_bounds = array<i64: 10, 128>}, {pipeline_mode = #tpu.pipeline_mode<synchronous>, transform_indices = @transform_1, window_bounds = array<i64: 64, 10>}, {pipeline_mode = #tpu.pipeline_mode<synchronous>, transform_indices = @transform_2, window_bounds = array<i64: 64, 1>}, {pipeline_mode = #tpu.pipeline_mode<synchronous>, transform_indices = @transform_3, window_bounds = array<i64: 32, 64>}, {pipeline_mode = #tpu.pipeline_mode<synchronous>, transform_indices = @transform_4, window_bounds = array<i64: 32, 1>}, {pipeline_mode = #tpu.pipeline_mode<synchronous>, transform_indices = @transform_5, window_bounds = array<i64: 1, 32>}, {pipeline_mode = #tpu.pipeline_mode<synchronous>, transform_indices = @transform_6, window_bounds = array<i64: 1, 1>}, {transform_indices = @transform_7, window_bounds = array<i64: 1, 128>}]} {
    %c0 = arith.constant 0 : index
    %c0_0 = arith.constant 0 : index
    %0 = vector.load %arg2[%c0, %c0_0] : memref<64x10xf32, #tpu.memory_space<vmem>>, vector<64x10xf32>
    %c0_1 = arith.constant 0 : index
    %c0_2 = arith.constant 0 : index
    %1 = vector.load %arg1[%c0_1, %c0_2] : memref<10x128xf32, #tpu.memory_space<vmem>>, vector<10x128xf32>
    %cst = arith.constant dense<0.000000e+00> : vector<64x128xf32>
    %2 = tpu.matmul %0, %1, %cst {dimension_numbers = #tpu.dot_dimension_numbers<[1], [0], [0], [1], [0, 0, 1, 1], [], []>} : vector<64x10xf32>, vector<10x128xf32>, vector<64x128xf32> -> vector<64x128xf32>
    %c0_3 = arith.constant 0 : index
    %c0_4 = arith.constant 0 : index
    %3 = vector.load %arg3[%c0_3, %c0_4] : memref<64x1xf32, #tpu.memory_space<vmem>>, vector<64x1xf32>
    %4 = vector.broadcast %3 : vector<64x1xf32> to vector<64x128xf32>
    %5 = arith.addf %2, %4 : vector<64x128xf32>
    %cst_5 = arith.constant 0.000000e+00 : f32
    %6 = vector.broadcast %cst_5 : f32 to vector<64x128xf32>
    %7 = arith.maximumf %5, %6 : vector<64x128xf32>
    %c0_6 = arith.constant 0 : index
    %c0_7 = arith.constant 0 : index
    %8 = vector.load %arg4[%c0_6, %c0_7] : memref<32x64xf32, #tpu.memory_space<vmem>>, vector<32x64xf32>
    %cst_8 = arith.constant dense<0.000000e+00> : vector<32x128xf32>
    %9 = tpu.matmul %8, %7, %cst_8 {dimension_numbers = #tpu.dot_dimension_numbers<[1], [0], [0], [1], [0, 0, 1, 1], [], []>} : vector<32x64xf32>, vector<64x128xf32>, vector<32x128xf32> -> vector<32x128xf32>
    %c0_9 = arith.constant 0 : index
    %c0_10 = arith.constant 0 : index
    %10 = vector.load %arg5[%c0_9, %c0_10] : memref<32x1xf32, #tpu.memory_space<vmem>>, vector<32x1xf32>
    %11 = vector.broadcast %10 : vector<32x1xf32> to vector<32x128xf32>
    %12 = arith.addf %9, %11 : vector<32x128xf32>
    %cst_11 = arith.constant 0.000000e+00 : f32
    %13 = vector.broadcast %cst_11 : f32 to vector<32x128xf32>
    %14 = arith.maximumf %12, %13 : vector<32x128xf32>
    %c0_12 = arith.constant 0 : index
    %c0_13 = arith.constant 0 : index
    %15 = vector.load %arg6[%c0_12, %c0_13] : memref<1x32xf32, #tpu.memory_space<vmem>>, vector<1x32xf32>
    %cst_14 = arith.constant dense<0.000000e+00> : vector<1x128xf32>
    %16 = tpu.matmul %15, %14, %cst_14 {dimension_numbers = #tpu.dot_dimension_numbers<[1], [0], [0], [1], [0, 0, 1, 1], [], []>} : vector<1x32xf32>, vector<32x128xf32>, vector<1x128xf32> -> vector<1x128xf32>
    %c0_15 = arith.constant 0 : index
    %c0_16 = arith.constant 0 : index
    %17 = vector.load %arg7[%c0_15, %c0_16] : memref<1x1xf32, #tpu.memory_space<vmem>>, vector<1x1xf32>
    %18 = vector.broadcast %17 : vector<1x1xf32> to vector<1x128xf32>
    %19 = arith.addf %16, %18 : vector<1x128xf32>
    %c0_17 = arith.constant 0 : index
    %c0_18 = arith.constant 0 : index
    %20 = vector.load %arg8[%c0_17, %c0_18] : memref<1x128xf32, #tpu.memory_space<vmem>>, vector<1x128xf32>
    tpu.vector_store %arg8[%c0_17, %c0_18], %19 {strides = array<i32>} : memref<1x128xf32, #tpu.memory_space<vmem>>, vector<1x128xf32>,
    return
  }
  func.func @transform_0(%arg0: i32) -> (i32, i32) {
    %c0_i32 = arith.constant 0 : i32
    %c0_i32_0 = arith.constant 0 : i32
    return %c0_i32, %arg0 : i32, i32
  }
  func.func @transform_1(%arg0: i32) -> (i32, i32) {
    %c0_i32 = arith.constant 0 : i32
    %c0_i32_0 = arith.constant 0 : i32
    %c0_i32_1 = arith.constant 0 : i32
    return %c0_i32, %c0_i32_0 : i32, i32
  }
  func.func @transform_2(%arg0: i32) -> (i32, i32) {
    %c0_i32 = arith.constant 0 : i32
    %c0_i32_0 = arith.constant 0 : i32
    %c0_i32_1 = arith.constant 0 : i32
    return %c0_i32, %c0_i32_0 : i32, i32
  }
  func.func @transform_3(%arg0: i32) -> (i32, i32) {
    %c0_i32 = arith.constant 0 : i32
    %c0_i32_0 = arith.constant 0 : i32
    %c0_i32_1 = arith.constant 0 : i32
    return %c0_i32, %c0_i32_0 : i32, i32
  }
  func.func @transform_4(%arg0: i32) -> (i32, i32) {
    %c0_i32 = arith.constant 0 : i32
    %c0_i32_0 = arith.constant 0 : i32
    %c0_i32_1 = arith.constant 0 : i32
    return %c0_i32, %c0_i32_0 : i32, i32
  }
  func.func @transform_5(%arg0: i32) -> (i32, i32) {
    %c0_i32 = arith.constant 0 : i32
    %c0_i32_0 = arith.constant 0 : i32
    %c0_i32_1 = arith.constant 0 : i32
    return %c0_i32, %c0_i32_0 : i32, i32
  }
  func.func @transform_6(%arg0: i32) -> (i32, i32) {
    %c0_i32 = arith.constant 0 : i32
    %c0_i32_0 = arith.constant 0 : i32
    %c0_i32_1 = arith.constant 0 : i32
    return %c0_i32, %c0_i32_0 : i32, i32
  }
  func.func @transform_7(%arg0: i32) -> (i32, i32) {
    %c0_i32 = arith.constant 0 : i32
    %c0_i32_0 = arith.constant 0 : i32
    return %c0_i32, %arg0 : i32, i32
  }
}

</mosaic_0001>

<llo_original>
// kernel: tpu_custom_call.1
$region0: #{tpu_custom_call.1}
  #allocation0 [shape = 'u32[]', space=smem, size = 0x4, offset = 0x4, fixed_abs, tag = 'smem constant byte address 0x4 - core index']
  #allocation1 [shape = 'u32[144,128]{1,0:T(1,128)}', space=vmem, size = 0x12000, scoped, tag = 'internal scratch']
  #allocation2 [shape = 'f32[1,1]{1,0:T(1,128)S(1)}', space=vmem, size = 0x200, scoped, tag = 'scoped memory for tpu_custom_call.1']
  %s0 = inlined_call_operand.vmem [shape: f32[10,256], index: 0, kind: input, shape index: {}]
  %s1 = inlined_call_operand.vmem [shape: f32[64,10], index: 1, kind: input, shape index: {}]
  %s2 = inlined_call_operand.vmem [shape: f32[64,1], index: 2, kind: input, shape index: {}]
  %s3 = inlined_call_operand.vmem [shape: f32[32,64], index: 3, kind: input, shape index: {}]
  %s4 = inlined_call_operand.vmem [shape: f32[32,1], index: 4, kind: input, shape index: {}]
  %s5 = inlined_call_operand.vmem [shape: f32[1,32], index: 5, kind: input, shape index: {}]
  %s6 = inlined_call_operand.<no memory space> [shape: f32[1,1], index: 6, kind: input, shape index: {}]
  %s7 = inlined_call_operand.hbm [shape: f32[1,256], index: 7, kind: output, shape index: {}]
  %s8 = sld [smem:[#allocation0]]
  $region99: #{tpu_custom_call.1} parent=0
    _
  %s10 = ssub.s32 1, %s8
  %s11 = scalar_select 0, %s10, %s8
  %v12 = vstv %s6
  %13 = vst [vmem:[#allocation2] sm:$0x1] %v12
  $region1: #{tpu_custom_call.1} parent=0
    #allocation3 [shape = 'u8[16384]{0}', space=vmem, size = 0x4000, scoped, tag = 'input window, operand 0']
    #allocation4 [shape = 'u8[1024]{0}', space=vmem, size = 0x400, scoped, tag = 'output window, operand 0']
    #allocation5 [shape = 's32[2]{0}', space=sflag, size = 0x8, scoped, tag = 'scoped memory for tpu_custom_call.1']
    %14 = vsyncpa [#allocation5], 0
    %s15 = scalar_lea.sflag [#allocation5], 1
    %16 = vsyncpa %s15, 0
    loop: start=0, step=1, limit=4
    $region2: #{tpu_custom_call.1} parent=1 // loop_pre_header
      _
    $region3: #{tpu_custom_call.1} parent=1 // loop_header
      %s18 = sphi 0, %s22
      %p19 = scmp.ge.s32.totalorder %s18, 4
      %s28 = sphi 0, %s30
      %s31 = sphi 0, %s28
      %s32 = sphi 0, %s31
      %s48 = sphi 0, %s32
      %s52 = sphi 0, %s52
      %s54 = sphi 0, %s52
      %s55 = sphi 0, %s54
      %s69 = sphi 0, %s55
      %s73 = sphi 0, %s73
      %s75 = sphi 0, %s73
      %s76 = sphi 0, %s75
      %s90 = sphi 0, %s76
      %s94 = sphi 0, %s94
      %s96 = sphi 0, %s94
      %s97 = sphi 0, %s96
      %s111 = sphi 0, %s97
      %s115 = sphi 0, %s115
      %s117 = sphi 0, %s115
      %s118 = sphi 0, %s117
      %s132 = sphi 0, %s118
      %s136 = sphi 0, %s136
      %s138 = sphi 0, %s136
      %s139 = sphi 0, %s138
      %s153 = sphi 0, %s139
      %s157 = sphi 0, %s157
      %s159 = sphi 0, %s157
      %s160 = sphi 0, %s159
      %s174 = sphi 0, %s160
      %s180 = sphi 0, %s182
      %s183 = sphi 0, %s180
      %s184 = sphi 0, %s183
      %s200 = sphi 0, %s184
    $region4: #{tpu_custom_call.1} parent=1 // loop_header_branch
      %21 = sbr.rel (%p19) target = $region8
    $region5: #{tpu_custom_call.1} parent=1 // loop_body
      %s23 = ssub.s32 %s18, 1
      %s24 = ssub.s32 %s18, 2
      %s25 = sadd.s32 %s18, 1
      %s26 = ssub.s32 %s18, %s25
      %p27 = scmp.eq.s32.totalorder %s26, 0
      %s29 = sadd.s32 %s28, 1
      %s30 = scalar_select %p27, %s28, %s29
      %p33 = pneg %p27
      %p34 = scmp.eq.s32.totalorder %s18, 1
      %p35 = por %p33, %p34
      %p36 = scmp.ne.s32.totalorder %s28, %s31
      %p37 = scmp.eq.s32.totalorder %s18, 0
      %p38 = por %p36, %p37
      %p39 = scmp.ne.s32.totalorder %s28, %s31
      %p40 = scmp.eq.s32.totalorder %s23, 1
      %p41 = por %p39, %p40
      %p42 = scmp.ne.s32.totalorder %s31, %s32
      %p43 = scmp.eq.s32.totalorder %s23, 0
      %p44 = por %p42, %p43
      %p45 = scmp.ne.s32.totalorder %s31, %s32
      %p46 = scmp.eq.s32.totalorder %s24, 1
      %p47 = por %p45, %p46
      %p49 = scmp.ne.s32.totalorder %s32, %s48
      %p50 = scmp.eq.s32.totalorder %s24, 0
      %p51 = por %p49, %p50
      %s53 = sadd.s32 %s52, 1
      %p56 = scmp.eq.s32.totalorder %s18, 1
      %p57 = scmp.ne.s32.totalorder %s52, %s54
      %p58 = scmp.eq.s32.totalorder %s18, 0
      %p59 = por %p57, %p58
      %p60 = scmp.ne.s32.totalorder %s52, %s54
      %p61 = scmp.eq.s32.totalorder %s23, 1
      %p62 = por %p60, %p61
      %p63 = scmp.ne.s32.totalorder %s54, %s55
      %p64 = scmp.eq.s32.totalorder %s23, 0
      %p65 = por %p63, %p64
      %p66 = scmp.ne.s32.totalorder %s54, %s55
      %p67 = scmp.eq.s32.totalorder %s24, 1
      %p68 = por %p66, %p67
      %p70 = scmp.ne.s32.totalorder %s55, %s69
      %p71 = scmp.eq.s32.totalorder %s24, 0
      %p72 = por %p70, %p71
      %s74 = sadd.s32 %s73, 1
      %p77 = scmp.eq.s32.totalorder %s18, 1
      %p78 = scmp.ne.s32.totalorder %s73, %s75
      %p79 = scmp.eq.s32.totalorder %s18, 0
      %p80 = por %p78, %p79
      %p81 = scmp.ne.s32.totalorder %s73, %s75
      %p82 = scmp.eq.s32.totalorder %s23, 1
      %p83 = por %p81, %p82
      %p84 = scmp.ne.s32.totalorder %s75, %s76
      %p85 = scmp.eq.s32.totalorder %s23, 0
      %p86 = por %p84, %p85
      %p87 = scmp.ne.s32.totalorder %s75, %s76
      %p88 = scmp.eq.s32.totalorder %s24, 1
      %p89 = por %p87, %p88
      %p91 = scmp.ne.s32.totalorder %s76, %s90
      %p92 = scmp.eq.s32.totalorder %s24, 0
      %p93 = por %p91, %p92
      %s95 = sadd.s32 %s94, 1
      %p98 = scmp.eq.s32.totalorder %s18, 1
      %p99 = scmp.ne.s32.totalorder %s94, %s96
      %p100 = scmp.eq.s32.totalorder %s18, 0
      %p101 = por %p99, %p100
      %p102 = scmp.ne.s32.totalorder %s94, %s96
      %p103 = scmp.eq.s32.totalorder %s23, 1
      %p104 = por %p102, %p103
      %p105 = scmp.ne.s32.totalorder %s96, %s97
      %p106 = scmp.eq.s32.totalorder %s23, 0
      %p107 = por %p105, %p106
      %p108 = scmp.ne.s32.totalorder %s96, %s97
      %p109 = scmp.eq.s32.totalorder %s24, 1
      %p110 = por %p108, %p109
      %p112 = scmp.ne.s32.totalorder %s97, %s111
      %p113 = scmp.eq.s32.totalorder %s24, 0
      %p114 = por %p112, %p113
      %s116 = sadd.s32 %s115, 1
      %p119 = scmp.eq.s32.totalorder %s18, 1
      %p120 = scmp.ne.s32.totalorder %s115, %s117
      %p121 = scmp.eq.s32.totalorder %s18, 0
      %p122 = por %p120, %p121
      %p123 = scmp.ne.s32.totalorder %s115, %s117
      %p124 = scmp.eq.s32.totalorder %s23, 1
      %p125 = por %p123, %p124
      %p126 = scmp.ne.s32.totalorder %s117, %s118
      %p127 = scmp.eq.s32.totalorder %s23, 0
      %p128 = por %p126, %p127
      %p129 = scmp.ne.s32.totalorder %s117, %s118
      %p130 = scmp.eq.s32.totalorder %s24, 1
      %p131 = por %p129, %p130
      %p133 = scmp.ne.s32.totalorder %s118, %s132
      %p134 = scmp.eq.s32.totalorder %s24, 0
      %p135 = por %p133, %p134
      %s137 = sadd.s32 %s136, 1
      %p140 = scmp.eq.s32.totalorder %s18, 1
      %p141 = scmp.ne.s32.totalorder %s136, %s138
      %p142 = scmp.eq.s32.totalorder %s18, 0
      %p143 = por %p141, %p142
      %p144 = scmp.ne.s32.totalorder %s136, %s138
      %p145 = scmp.eq.s32.totalorder %s23, 1
      %p146 = por %p144, %p145
      %p147 = scmp.ne.s32.totalorder %s138, %s139
      %p148 = scmp.eq.s32.totalorder %s23, 0
      %p149 = por %p147, %p148
      %p150 = scmp.ne.s32.totalorder %s138, %s139
      %p151 = scmp.eq.s32.totalorder %s24, 1
      %p152 = por %p150, %p151
      %p154 = scmp.ne.s32.totalorder %s139, %s153
      %p155 = scmp.eq.s32.totalorder %s24, 0
      %p156 = por %p154, %p155
      %s158 = sadd.s32 %s157, 1
      %p161 = scmp.eq.s32.totalorder %s18, 1
      %p162 = scmp.ne.s32.totalorder %s157, %s159
      %p163 = scmp.eq.s32.totalorder %s18, 0
      %p164 = por %p162, %p163
      %p165 = scmp.ne.s32.totalorder %s157, %s159
      %p166 = scmp.eq.s32.totalorder %s23, 1
      %p167 = por %p165, %p166
      %p168 = scmp.ne.s32.totalorder %s159, %s160
      %p169 = scmp.eq.s32.totalorder %s23, 0
      %p170 = por %p168, %p169
      %p171 = scmp.ne.s32.totalorder %s159, %s160
      %p172 = scmp.eq.s32.totalorder %s24, 1
      %p173 = por %p171, %p172
      %p175 = scmp.ne.s32.totalorder %s160, %s174
      %p176 = scmp.eq.s32.totalorder %s24, 0
      %p177 = por %p175, %p176
      %s178 = ssub.s32 %s18, %s25
      %p179 = scmp.eq.s32.totalorder %s178, 0
      %s181 = sadd.s32 %s180, 1
      %s182 = scalar_select %p179, %s180, %s181
      %p185 = pneg %p179
      %p186 = scmp.eq.s32.totalorder %s18, 1
      %p187 = por %p185, %p186
      %p188 = scmp.ne.s32.totalorder %s180, %s183
      %p189 = scmp.eq.s32.totalorder %s18, 0
      %p190 = por %p188, %p189
      %p191 = scmp.ne.s32.totalorder %s180, %s183
      %p192 = scmp.eq.s32.totalorder %s23, 1
      %p193 = por %p191, %p192
      %p194 = scmp.ne.s32.totalorder %s183, %s184
      %p195 = scmp.eq.s32.totalorder %s23, 0
      %p196 = por %p194, %p195
      %p197 = scmp.ne.s32.totalorder %s183, %s184
      %p198 = scmp.eq.s32.totalorder %s24, 1
      %p199 = por %p197, %p198
      %p201 = scmp.ne.s32.totalorder %s184, %s200
      %p202 = scmp.eq.s32.totalorder %s24, 0
      %p203 = por %p201, %p202
      %p204 = scmp.le.s32.totalorder 1, %s18
      %p205 = scmp.lt.s32.totalorder %s18, 3
      %p206 = pnand %p204, %p205
      %p207 = pneg %p206
      // Predicated region
      $region9: #{tpu_custom_call.1} parent=5 // pred_check
        _
      $region10: #{tpu_custom_call.1} parent=5 // pred_check_branch
        %209 = sbr.rel (%p206) target = $region12
      $region11: #{tpu_custom_call.1} parent=5 // pred_region
        %s210 = ssub.s32 %s18, 1
        // Predicated region
        $region13: #{tpu_custom_call.1} parent=11 // pred_check
          %p211 = pneg %p65
        $region14: #{tpu_custom_call.1} parent=11 // pred_check_branch
          %213 = sbr.rel (%p211) target = $region16
        $region15: #{tpu_custom_call.1} parent=11 // pred_region
          _
        $region16: #{tpu_custom_call.1} parent=11 // pred_fallthru
          _
        // Predicated region
        $region17: #{tpu_custom_call.1} parent=11 // pred_check
          %p214 = pneg %p86
        $region18: #{tpu_custom_call.1} parent=11 // pred_check_branch
          %216 = sbr.rel (%p214) target = $region20
        $region19: #{tpu_custom_call.1} parent=11 // pred_region
          _
        $region20: #{tpu_custom_call.1} parent=11 // pred_fallthru
          _
        // Predicated region
        $region21: #{tpu_custom_call.1} parent=11 // pred_check
          %p217 = pneg %p107
        $region22: #{tpu_custom_call.1} parent=11 // pred_check_branch
          %219 = sbr.rel (%p217) target = $region24
        $region23: #{tpu_custom_call.1} parent=11 // pred_region
          _
        $region24: #{tpu_custom_call.1} parent=11 // pred_fallthru
          _
        // Predicated region
        $region25: #{tpu_custom_call.1} parent=11 // pred_check
          %p220 = pneg %p128
        $region26: #{tpu_custom_call.1} parent=11 // pred_check_branch
          %222 = sbr.rel (%p220) target = $region28
        $region27: #{tpu_custom_call.1} parent=11 // pred_region
          _
        $region28: #{tpu_custom_call.1} parent=11 // pred_fallthru
          _
        // Predicated region
        $region29: #{tpu_custom_call.1} parent=11 // pred_check
          %p223 = pneg %p149
        $region30: #{tpu_custom_call.1} parent=11 // pred_check_branch
          %225 = sbr.rel (%p223) target = $region32
        $region31: #{tpu_custom_call.1} parent=11 // pred_region
          _
        $region32: #{tpu_custom_call.1} parent=11 // pred_fallthru
          _
        // Predicated region
        $region33: #{tpu_custom_call.1} parent=11 // pred_check
          %p226 = pneg %p170
        $region34: #{tpu_custom_call.1} parent=11 // pred_check_branch
          %228 = sbr.rel (%p226) target = $region36
        $region35: #{tpu_custom_call.1} parent=11 // pred_region
          _
        $region36: #{tpu_custom_call.1} parent=11 // pred_fallthru
          _
      $region12: #{tpu_custom_call.1} parent=5 // pred_fallthru
        _
      %p229 = scmp.lt.s32.totalorder %s18, 2
      // Predicated region
      $region37: #{tpu_custom_call.1} parent=5 // pred_check
        %p230 = pneg %p229
      $region38: #{tpu_custom_call.1} parent=5 // pred_check_branch
        %232 = sbr.rel (%p230) target = $region40
      $region39: #{tpu_custom_call.1} parent=5 // pred_region
        // Predicated region
        $region41: #{tpu_custom_call.1} parent=39 // pred_check
          %p233 = pneg %p38
        $region42: #{tpu_custom_call.1} parent=39 // pred_check_branch
          %235 = sbr.rel (%p233) target = $region44
        $region43: #{tpu_custom_call.1} parent=39 // pred_region
          %s236 = sand.u32 %s28, 1
          %s237 = sand.u32 %s28, 1
          %s238 = smul.addr %s237, 16
          %s239 = scalar_lea.vmem [#allocation3], %s238
          %s240 = smul.addr %s18, 8
          %s241 = scalar_lea.vmem %s0, %s240
          // Predicated region
          $region45: #{tpu_custom_call.1} parent=43 // pred_check
            _
          $region46: #{tpu_custom_call.1} parent=43 // pred_check_branch
            %243 = sbr.rel (0) target = $region48
          $region47: #{tpu_custom_call.1} parent=43 // pred_region
            // Predicated region
            $region49: #{tpu_custom_call.1} parent=47 // pred_check
              _
            $region50: #{tpu_custom_call.1} parent=47 // pred_check_branch
              %245 = sbr.rel (0) target = $region52
            $region51: #{tpu_custom_call.1} parent=47 // pred_region
              // Predicated region
              $region64: #{tpu_custom_call.1} parent=51 // pred_check
                _
              $region65: #{tpu_custom_call.1} parent=51 // pred_check_branch
                %263 = sbr.rel (0) target = $region67
              $region66: #{tpu_custom_call.1} parent=51 // pred_region
                loop: start=0, step=1, limit=1
                $region68: #{tpu_custom_call.1} parent=66 // loop_pre_header
                  _
                $region69: #{tpu_custom_call.1} parent=66 // loop_header
                  %s265 = sphi 0, %s269
                  %p266 = scmp.ge.s32.totalorder %s265, 1
                  %s270 = sphi %s241, %s241
                  %s271 = sphi %s239, %s239
                $region70: #{tpu_custom_call.1} parent=66 // loop_header_branch
                  %268 = sbr.rel (%p266) target = $region74
                $region71: #{tpu_custom_call.1} parent=66 // loop_body
                  %v272 = vld [vmem:[%s270] sm:$0xff]
                  %273 = vst [vmem:[%s271] sm:$0xff] %v272
                  %v274 = vld [vmem:[%s270 + $0x10] sm:$0xff]
                  %275 = vst [vmem:[%s271 + $0x8] sm:$0xff] %v274
                $region72: #{tpu_custom_call.1} parent=66 // loop_footer
                  %s269 = sadd.s32 1, %s265
                $region73: #{tpu_custom_call.1} parent=66 // loop_footer_branch
                  %264 = sbr.rel target = $region69
                $region74: #{tpu_custom_call.1} parent=66 // loop_exit
                  _
              $region67: #{tpu_custom_call.1} parent=51 // pred_fallthru
                _
              // Predicated region
              $region75: #{tpu_custom_call.1} parent=51 // pred_check
                _
              $region76: #{tpu_custom_call.1} parent=51 // pred_check_branch
                %277 = sbr.rel target = $region78
              $region77: #{tpu_custom_call.1} parent=51 // pred_region
                _
              $region78: #{tpu_custom_call.1} parent=51 // pred_fallthru
                _
            $region52: #{tpu_custom_call.1} parent=47 // pred_fallthru
              _
            // Predicated region
            $region53: #{tpu_custom_call.1} parent=47 // pred_check
              _
            $region54: #{tpu_custom_call.1} parent=47 // pred_check_branch
              %247 = sbr.rel target = $region56
            $region55: #{tpu_custom_call.1} parent=47 // pred_region
              %s249 = ssub.s32 256, 1
              loop: start=0, step=1, limit=1
              $region57: #{tpu_custom_call.1} parent=55 // loop_pre_header
                _
              $region58: #{tpu_custom_call.1} parent=55 // loop_header
                %s251 = sphi 0, %s255
                %p252 = scmp.ge.s32.totalorder %s251, 1
                %s256 = sphi %s241, %s241
                %s257 = sphi %s239, %s239
              $region59: #{tpu_custom_call.1} parent=55 // loop_header_branch
                %254 = sbr.rel (%p252) target = $region63
              $region60: #{tpu_custom_call.1} parent=55 // loop_body
                %v258 = vld [vmem:[%s256] sm:%s249]
                %259 = vst [vmem:[%s257] sm:%s249] %v258
                %v260 = vld [vmem:[%s256 + $0x10] sm:%s249]
                %261 = vst [vmem:[%s257 + $0x8] sm:%s249] %v260
              $region61: #{tpu_custom_call.1} parent=55 // loop_footer
                %s255 = sadd.s32 1, %s251
              $region62: #{tpu_custom_call.1} parent=55 // loop_footer_branch
                %250 = sbr.rel target = $region58
              $region63: #{tpu_custom_call.1} parent=55 // loop_exit
                _
            $region56: #{tpu_custom_call.1} parent=47 // pred_fallthru
              _
          $region48: #{tpu_custom_call.1} parent=43 // pred_fallthru
            _
          %278 = vnop
        $region44: #{tpu_custom_call.1} parent=39 // pred_fallthru
          _
      $region40: #{tpu_custom_call.1} parent=5 // pred_fallthru
        _
      %p279 = scmp.le.s32.totalorder 1, %s18
      %p280 = scmp.lt.s32.totalorder %s18, 3
      %p281 = pnand %p279, %p280
      %p282 = pneg %p281
      // Predicated region
      $region79: #{tpu_custom_call.1} parent=5 // pred_check
        _
      $region80: #{tpu_custom_call.1} parent=5 // pred_check_branch
        %284 = sbr.rel (%p281) target = $region82
      $region81: #{tpu_custom_call.1} parent=5 // pred_region
        %s285 = ssub.s32 %s18, 1
        %s286 = sand.u32 %s31, 1
        %s287 = sand.u32 %s31, 1
        %s288 = smul.addr %s287, 16
        %s289 = scalar_lea.vmem [#allocation3], %s288
        // Predicated region
        $region83: #{tpu_custom_call.1} parent=81 // pred_check
          %p290 = pneg %p44
        $region84: #{tpu_custom_call.1} parent=81 // pred_check_branch
          %292 = sbr.rel (%p290) target = $region86
        $region85: #{tpu_custom_call.1} parent=81 // pred_region
          _
        $region86: #{tpu_custom_call.1} parent=81 // pred_fallthru
          _
        %s293 = sand.u32 %s31, 1
        %s294 = sand.u32 %s31, 1
        %s295 = smul.addr %s294, 16
        %s296 = scalar_lea.vmem [#allocation3], %s295
        %p297 = pneg %p44
        %p298 = pneg %p41
        %p299 = pneg %p65
        %p300 = pneg %p62
        %p301 = pneg %p86
        %p302 = pneg %p83
        %p303 = pneg %p107
        %p304 = pneg %p104
        %p305 = pneg %p128
        %p306 = pneg %p125
        %p307 = pneg %p149
        %p308 = pneg %p146
        %p309 = pneg %p170
        %p310 = pneg %p167
        %p311 = pneg %p196
        %p312 = pneg %p193
        %s313 = sand.u32 %s183, 1
        %s314 = scalar_lea.sflag [#allocation5], %s313
        %s315 = sand.u32 %s183, 1
        %s316 = scalar_lea.vmem [#allocation4], %s315
        %v317 = vld [vmem:[%s1] sm:$0xff]
        %v318 = vld [vmem:[%s1 + $0x8] sm:$0xff]
        %v319 = vld [vmem:[%s1 + $0x10] sm:$0xff]
        %v320 = vld [vmem:[%s1 + $0x18] sm:$0xff]
        %v321 = vld [vmem:[%s1 + $0x20] sm:$0xff]
        %v322 = vld [vmem:[%s1 + $0x28] sm:$0xff]
        %v323 = vld [vmem:[%s1 + $0x30] sm:$0xff]
        %v324 = vld [vmem:[%s1 + $0x38] sm:$0xff]
        %v325 = vld [vmem:[%s289] sm:$0xff]
        %v326 = vld [vmem:[%s289 + $0x8] sm:$0x3]
        %v327 = vld [vmem:[%s2] sm:$0xff]
        %v328 = vld [vmem:[%s2 + $0x8] sm:$0xff]
        %v329 = vld [vmem:[%s2 + $0x10] sm:$0xff]
        %v330 = vld [vmem:[%s2 + $0x18] sm:$0xff]
        %v331 = vld [vmem:[%s2 + $0x20] sm:$0xff]
        %v332 = vld [vmem:[%s2 + $0x28] sm:$0xff]
        %v333 = vld [vmem:[%s2 + $0x30] sm:$0xff]
        %v334 = vld [vmem:[%s2 + $0x38] sm:$0xff]
        %336 = vset.pattern.permute.xlu0 0
        %337 = vperm.xlu0 %336, %v327
        %v338 = vpop.permute.xlu0 %337
        %341 = vset.pattern.permute.xlu0 0
        %342 = vperm.xlu0 %341, %v328
        %v343 = vpop.permute.xlu0 %342
        %346 = vset.pattern.permute.xlu0 0
        %347 = vperm.xlu0 %346, %v329
        %v348 = vpop.permute.xlu0 %347
        %351 = vset.pattern.permute.xlu0 0
        %352 = vperm.xlu0 %351, %v330
        %v353 = vpop.permute.xlu0 %352
        %356 = vset.pattern.permute.xlu0 0
        %357 = vperm.xlu0 %356, %v331
        %v358 = vpop.permute.xlu0 %357
        %361 = vset.pattern.permute.xlu0 0
        %362 = vperm.xlu0 %361, %v332
        %v363 = vpop.permute.xlu0 %362
        %366 = vset.pattern.permute.xlu0 0
        %367 = vperm.xlu0 %366, %v333
        %v368 = vpop.permute.xlu0 %367
        %371 = vset.pattern.permute.xlu0 0
        %372 = vperm.xlu0 %371, %v334
        %v373 = vpop.permute.xlu0 %372
        %vm375 = vcmask 80896
        %v377 = vsel %vm375, %v317, 0
        %v380 = vsel %vm375, %v318, 0
        %v383 = vsel %vm375, %v319, 0
        %v386 = vsel %vm375, %v320, 0
        %v389 = vsel %vm375, %v321, 0
        %v392 = vsel %vm375, %v322, 0
        %v395 = vsel %vm375, %v323, 0
        %v398 = vsel %vm375, %v324, 0
        %vm400 = vcmask 1041408
        %v402 = vsel %vm400, %v326, 0
        %404 = vmatprep.subr.mxu0 0.0
        %405 = vmatpush1.msra.mxu0 0.0
        %406 = vmatprep.subr.mxu0 0.0
        %407 = vmatpush1.msra.mxu0 0.0
        %408 = vmatprep.subr.mxu0 0.0
        %409 = vmatpush1.msra.mxu0 0.0
        %410 = vmatprep.subr.mxu0 0.0
        %411 = vmatpush1.msra.mxu0 0.0
        %412 = vmatprep.subr.mxu0 0.0
        %413 = vmatpush1.msra.mxu0 0.0
        %414 = vmatprep.subr.mxu0 0.0
        %415 = vmatpush1.msra.mxu0 0.0
        %416 = vmatprep.subr.mxu0 0.0
        %417 = vmatpush1.msra.mxu0 0.0
        %418 = vmatprep.subr.mxu0 0.0
        %419 = vmatpush1.msra.mxu0 0.0
        %420 = vmatprep.subr.mxu0 0.0
        %421 = vmatpush1.msra.mxu0 0.0
        %422 = vmatprep.subr.mxu0 0.0
        %423 = vmatpush1.msra.mxu0 0.0
        %424 = vmatprep.subr.mxu0 0.0
        %425 = vmatpush1.msra.mxu0 0.0
        %426 = vmatprep.subr.mxu0 0.0
        %427 = vmatpush1.msra.mxu0 0.0
        %428 = vmatprep.subr.mxu0 0.0
        %429 = vmatpush1.msra.mxu0 0.0
        %430 = vmatprep.subr.mxu0 0.0
        %431 = vmatpush1.msra.mxu0 0.0
        %432 = vmatprep.subr.mxu0 0.0
        %433 = vmatpush1.msra.mxu0 %v402
        %434 = vmatprep.subr.mxu0 0.0
        %435 = vmatpush1.msra.mxu0 %v325
        %436 = vmatprep.subr.mxu0 0.0
        %437 = vmatpush2.msra.mxu0 0.0
        %438 = vmatprep.subr.mxu0 0.0
        %439 = vmatpush2.msra.mxu0 0.0
        %440 = vmatprep.subr.mxu0 0.0
        %441 = vmatpush2.msra.mxu0 0.0
        %442 = vmatprep.subr.mxu0 0.0
        %443 = vmatpush2.msra.mxu0 0.0
        %444 = vmatprep.subr.mxu0 0.0
        %445 = vmatpush2.msra.mxu0 0.0
        %446 = vmatprep.subr.mxu0 0.0
        %447 = vmatpush2.msra.mxu0 0.0
        %448 = vmatprep.subr.mxu0 0.0
        %449 = vmatpush2.msra.mxu0 0.0
        %450 = vmatprep.subr.mxu0 0.0
        %451 = vmatpush2.msra.mxu0 0.0
        %452 = vmatprep.subr.mxu0 0.0
        %453 = vmatpush2.msra.mxu0 0.0
        %454 = vmatprep.subr.mxu0 0.0
        %455 = vmatpush2.msra.mxu0 0.0
        %456 = vmatprep.subr.mxu0 0.0
        %457 = vmatpush2.msra.mxu0 0.0
        %458 = vmatprep.subr.mxu0 0.0
        %459 = vmatpush2.msra.mxu0 0.0
        %460 = vmatprep.subr.mxu0 0.0
        %461 = vmatpush2.msra.mxu0 0.0
        %462 = vmatprep.subr.mxu0 0.0
        %463 = vmatpush2.msra.mxu0 0.0
        %464 = vmatprep.subr.mxu0 0.0
        %465 = vmatpush2.msra.mxu0 0.0
        %466 = vmatprep.subr.mxu0 0.0
        %467 = vmatpush2.msra.mxu0 0.0
        %468 = vmatprep.mubr.f32.mxu0 0.0
        %469 = vmatmul.mubr.f32.gmra.mxu0 %v377
        %v470 = vpop.f32.mrf.mxu0
        %v471 = vadd.f32 %v338, %v470
        %v472 = vpop.f32.mrf.mxu0
        %473 = vmatprep.mubr.f32.mxu0 0.0
        %474 = vmatmul.mubr.f32.gmra.mxu0 %v380
        %v475 = vpop.f32.mrf.mxu0
        %v476 = vadd.f32 %v343, %v475
        %v477 = vpop.f32.mrf.mxu0
        %478 = vmatprep.mubr.f32.mxu0 0.0
        %479 = vmatmul.mubr.f32.gmra.mxu0 %v383
        %v480 = vpop.f32.mrf.mxu0
        %v481 = vadd.f32 %v348, %v480
        %v482 = vpop.f32.mrf.mxu0
        %483 = vmatprep.mubr.f32.mxu0 0.0
        %484 = vmatmul.mubr.f32.gmra.mxu0 %v386
        %v485 = vpop.f32.mrf.mxu0
        %v486 = vadd.f32 %v353, %v485
        %v487 = vpop.f32.mrf.mxu0
        %488 = vmatprep.mubr.f32.mxu0 0.0
        %489 = vmatmul.mubr.f32.gmra.mxu0 %v389
        %v490 = vpop.f32.mrf.mxu0
        %v491 = vadd.f32 %v358, %v490
        %v492 = vpop.f32.mrf.mxu0
        %493 = vmatprep.mubr.f32.mxu0 0.0
        %494 = vmatmul.mubr.f32.gmra.mxu0 %v392
        %v495 = vpop.f32.mrf.mxu0
        %v496 = vadd.f32 %v363, %v495
        %v497 = vpop.f32.mrf.mxu0
        %498 = vmatprep.mubr.f32.mxu0 0.0
        %499 = vmatmul.mubr.f32.gmra.mxu0 %v395
        %v500 = vpop.f32.mrf.mxu0
        %v501 = vadd.f32 %v368, %v500
        %v502 = vpop.f32.mrf.mxu0
        %503 = vmatprep.mubr.f32.mxu0 0.0
        %504 = vmatmul.mubr.f32.gmra.mxu0 %v398
        %v505 = vpop.f32.mrf.mxu0
        %v506 = vadd.f32 %v373, %v505
        %v507 = vpop.f32.mrf.mxu0
        %508 = vdwg.mxu0
        %v509 = vmax.f32 %v471, 0.0
        %v510 = vmax.f32 %v476, 0.0
        %v511 = vmax.f32 %v481, 0.0
        %v512 = vmax.f32 %v486, 0.0
        %v513 = vmax.f32 %v491, 0.0
        %v514 = vmax.f32 %v496, 0.0
        %v515 = vmax.f32 %v501, 0.0
        %v516 = vmax.f32 %v506, 0.0
        %v517 = vld [vmem:[%s3] sm:$0xff]
        %v518 = vld [vmem:[%s3 + $0x8] sm:$0xff]
        %v519 = vld [vmem:[%s3 + $0x10] sm:$0xff]
        %v520 = vld [vmem:[%s3 + $0x18] sm:$0xff]
        %v521 = vld [vmem:[%s4] sm:$0xff]
        %v522 = vld [vmem:[%s4 + $0x8] sm:$0xff]
        %v523 = vld [vmem:[%s4 + $0x10] sm:$0xff]
        %v524 = vld [vmem:[%s4 + $0x18] sm:$0xff]
        %526 = vset.pattern.permute.xlu0 0
        %527 = vperm.xlu0 %526, %v521
        %v528 = vpop.permute.xlu0 %527
        %531 = vset.pattern.permute.xlu0 0
        %532 = vperm.xlu0 %531, %v522
        %v533 = vpop.permute.xlu0 %532
        %536 = vset.pattern.permute.xlu0 0
        %537 = vperm.xlu0 %536, %v523
        %v538 = vpop.permute.xlu0 %537
        %541 = vset.pattern.permute.xlu0 0
        %542 = vperm.xlu0 %541, %v524
        %v543 = vpop.permute.xlu0 %542
        %vm545 = vcmask 523264
        %v547 = vsel %vm545, %v517, 0
        %v550 = vsel %vm545, %v518, 0
        %v553 = vsel %vm545, %v519, 0
        %v556 = vsel %vm545, %v520, 0
        %558 = vmatprep.subr.mxu0 0.0
        %559 = vmatpush1.msra.mxu0 0.0
        %560 = vmatprep.subr.mxu0 0.0
        %561 = vmatpush1.msra.mxu0 0.0
        %562 = vmatprep.subr.mxu0 0.0
        %563 = vmatpush1.msra.mxu0 0.0
        %564 = vmatprep.subr.mxu0 0.0
        %565 = vmatpush1.msra.mxu0 0.0
        %566 = vmatprep.subr.mxu0 0.0
        %567 = vmatpush1.msra.mxu0 0.0
        %568 = vmatprep.subr.mxu0 0.0
        %569 = vmatpush1.msra.mxu0 0.0
        %570 = vmatprep.subr.mxu0 0.0
        %571 = vmatpush1.msra.mxu0 0.0
        %572 = vmatprep.subr.mxu0 0.0
        %573 = vmatpush1.msra.mxu0 0.0
        %574 = vmatprep.subr.mxu0 0.0
        %575 = vmatpush1.msra.mxu0 %v516
        %576 = vmatprep.subr.mxu0 0.0
        %577 = vmatpush1.msra.mxu0 %v515
        %578 = vmatprep.subr.mxu0 0.0
        %579 = vmatpush1.msra.mxu0 %v514
        %580 = vmatprep.subr.mxu0 0.0
        %581 = vmatpush1.msra.mxu0 %v513
        %582 = vmatprep.subr.mxu0 0.0
        %583 = vmatpush1.msra.mxu0 %v512
        %584 = vmatprep.subr.mxu0 0.0
        %585 = vmatpush1.msra.mxu0 %v511
        %586 = vmatprep.subr.mxu0 0.0
        %587 = vmatpush1.msra.mxu0 %v510
        %588 = vmatprep.subr.mxu0 0.0
        %589 = vmatpush1.msra.mxu0 %v509
        %590 = vmatprep.subr.mxu0 0.0
        %591 = vmatpush2.msra.mxu0 0.0
        %592 = vmatprep.subr.mxu0 0.0
        %593 = vmatpush2.msra.mxu0 0.0
        %594 = vmatprep.subr.mxu0 0.0
        %595 = vmatpush2.msra.mxu0 0.0
        %596 = vmatprep.subr.mxu0 0.0
        %597 = vmatpush2.msra.mxu0 0.0
        %598 = vmatprep.subr.mxu0 0.0
        %599 = vmatpush2.msra.mxu0 0.0
        %600 = vmatprep.subr.mxu0 0.0
        %601 = vmatpush2.msra.mxu0 0.0
        %602 = vmatprep.subr.mxu0 0.0
        %603 = vmatpush2.msra.mxu0 0.0
        %604 = vmatprep.subr.mxu0 0.0
        %605 = vmatpush2.msra.mxu0 0.0
        %606 = vmatprep.subr.mxu0 0.0
        %607 = vmatpush2.msra.mxu0 0.0
        %608 = vmatprep.subr.mxu0 0.0
        %609 = vmatpush2.msra.mxu0 0.0
        %610 = vmatprep.subr.mxu0 0.0
        %611 = vmatpush2.msra.mxu0 0.0
        %612 = vmatprep.subr.mxu0 0.0
        %613 = vmatpush2.msra.mxu0 0.0
        %614 = vmatprep.subr.mxu0 0.0
        %615 = vmatpush2.msra.mxu0 0.0
        %616 = vmatprep.subr.mxu0 0.0
        %617 = vmatpush2.msra.mxu0 0.0
        %618 = vmatprep.subr.mxu0 0.0
        %619 = vmatpush2.msra.mxu0 0.0
        %620 = vmatprep.subr.mxu0 0.0
        %621 = vmatpush2.msra.mxu0 0.0
        %622 = vmatprep.mubr.f32.mxu0 0.0
        %623 = vmatmul.mubr.f32.gmra.mxu0 %v547
        %v624 = vpop.f32.mrf.mxu0
        %v625 = vadd.f32 %v528, %v624
        %v626 = vpop.f32.mrf.mxu0
        %627 = vmatprep.mubr.f32.mxu0 0.0
        %628 = vmatmul.mubr.f32.gmra.mxu0 %v550
        %v629 = vpop.f32.mrf.mxu0
        %v630 = vadd.f32 %v533, %v629
        %v631 = vpop.f32.mrf.mxu0
        %632 = vmatprep.mubr.f32.mxu0 0.0
        %633 = vmatmul.mubr.f32.gmra.mxu0 %v553
        %v634 = vpop.f32.mrf.mxu0
        %v635 = vadd.f32 %v538, %v634
        %v636 = vpop.f32.mrf.mxu0
        %637 = vmatprep.mubr.f32.mxu0 0.0
        %638 = vmatmul.mubr.f32.gmra.mxu0 %v556
        %v639 = vpop.f32.mrf.mxu0
        %v640 = vadd.f32 %v543, %v639
        %v641 = vpop.f32.mrf.mxu0
        %642 = vdwg.mxu0
        %v643 = vmax.f32 %v625, 0.0
        %v644 = vmax.f32 %v630, 0.0
        %v645 = vmax.f32 %v635, 0.0
        %v646 = vmax.f32 %v640, 0.0
        %v647 = vld [vmem:[%s5] sm:$0x1]
        %v648 = vld [vmem:[#allocation2] sm:$0x1]
        %650 = vset.pattern.permute.xlu0 0
        %651 = vperm.xlu0 %650, %v648
        %v652 = vpop.permute.xlu0 %651
        %v654 = vlaneseq
        %v655 = vshrl.u32 %v654, 7
        %v656 = vsub.s32 0, %v655
        %v657 = vrot.slane %v652, %v656
        %vm658 = vcmask 261120
        %v660 = vsel %vm658, %v647, 0
        %662 = vmatprep.subr.mxu0 0.0
        %663 = vmatpush1.msra.mxu0 0.0
        %664 = vmatprep.subr.mxu0 0.0
        %665 = vmatpush1.msra.mxu0 0.0
        %666 = vmatprep.subr.mxu0 0.0
        %667 = vmatpush1.msra.mxu0 0.0
        %668 = vmatprep.subr.mxu0 0.0
        %669 = vmatpush1.msra.mxu0 0.0
        %670 = vmatprep.subr.mxu0 0.0
        %671 = vmatpush1.msra.mxu0 0.0
        %672 = vmatprep.subr.mxu0 0.0
        %673 = vmatpush1.msra.mxu0 0.0
        %674 = vmatprep.subr.mxu0 0.0
        %675 = vmatpush1.msra.mxu0 0.0
        %676 = vmatprep.subr.mxu0 0.0
        %677 = vmatpush1.msra.mxu0 0.0
        %678 = vmatprep.subr.mxu0 0.0
        %679 = vmatpush1.msra.mxu0 0.0
        %680 = vmatprep.subr.mxu0 0.0
        %681 = vmatpush1.msra.mxu0 0.0
        %682 = vmatprep.subr.mxu0 0.0
        %683 = vmatpush1.msra.mxu0 0.0
        %684 = vmatprep.subr.mxu0 0.0
        %685 = vmatpush1.msra.mxu0 0.0
        %686 = vmatprep.subr.mxu0 0.0
        %687 = vmatpush1.msra.mxu0 %v646
        %688 = vmatprep.subr.mxu0 0.0
        %689 = vmatpush1.msra.mxu0 %v645
        %690 = vmatprep.subr.mxu0 0.0
        %691 = vmatpush1.msra.mxu0 %v644
        %692 = vmatprep.subr.mxu0 0.0
        %693 = vmatpush1.msra.mxu0 %v643
        %694 = vmatprep.subr.mxu0 0.0
        %695 = vmatpush2.msra.mxu0 0.0
        %696 = vmatprep.subr.mxu0 0.0
        %697 = vmatpush2.msra.mxu0 0.0
        %698 = vmatprep.subr.mxu0 0.0
        %699 = vmatpush2.msra.mxu0 0.0
        %700 = vmatprep.subr.mxu0 0.0
        %701 = vmatpush2.msra.mxu0 0.0
        %702 = vmatprep.subr.mxu0 0.0
        %703 = vmatpush2.msra.mxu0 0.0
        %704 = vmatprep.subr.mxu0 0.0
        %705 = vmatpush2.msra.mxu0 0.0
        %706 = vmatprep.subr.mxu0 0.0
        %707 = vmatpush2.msra.mxu0 0.0
        %708 = vmatprep.subr.mxu0 0.0
        %709 = vmatpush2.msra.mxu0 0.0
        %710 = vmatprep.subr.mxu0 0.0
        %711 = vmatpush2.msra.mxu0 0.0
        %712 = vmatprep.subr.mxu0 0.0
        %713 = vmatpush2.msra.mxu0 0.0
        %714 = vmatprep.subr.mxu0 0.0
        %715 = vmatpush2.msra.mxu0 0.0
        %716 = vmatprep.subr.mxu0 0.0
        %717 = vmatpush2.msra.mxu0 0.0
        %718 = vmatprep.subr.mxu0 0.0
        %719 = vmatpush2.msra.mxu0 0.0
        %720 = vmatprep.subr.mxu0 0.0
        %721 = vmatpush2.msra.mxu0 0.0
        %722 = vmatprep.subr.mxu0 0.0
        %723 = vmatpush2.msra.mxu0 0.0
        %724 = vmatprep.subr.mxu0 0.0
        %725 = vmatpush2.msra.mxu0 0.0
        %726 = vmatprep.mubr.f32.mxu0 0.0
        %727 = vmatmul.mubr.f32.gmra.mxu0 %v660
        %v728 = vpop.f32.mrf.mxu0
        %v729 = vadd.f32 %v657, %v728
        %v730 = vpop.f32.mrf.mxu0
        %731 = vdwg.mxu0
        %732 = vst [vmem:[%s316] sm:$0x1] %v729
        %s733 = sand.u32 %s183, 1
        %s734 = scalar_lea.sflag [#allocation5], %s733
        %s735 = sand.u32 %s183, 1
        %s736 = scalar_lea.vmem [#allocation4], %s735
        // Predicated region
        $region87: #{tpu_custom_call.1} parent=81 // pred_check
          %p737 = pneg %p193
        $region88: #{tpu_custom_call.1} parent=81 // pred_check_branch
          %739 = sbr.rel (%p737) target = $region90
        $region89: #{tpu_custom_call.1} parent=81 // pred_region
          %s741 = ssub.s32 16, 16
          %742 = vsyncadd %s734, %s741
          %s743 = smul.addr %s23, 16
          %s744 = scalar_lea.hbm %s7, %s743
          %s746 = sshll.u32 %s736, 4
          %s747 = int_to_ptr.vmem [resolvable:$true] %s746
          %749 = dma.vmem_to_hbm [thread:$0]  %s747, 16, %s744, %s734
        $region90: #{tpu_custom_call.1} parent=81 // pred_fallthru
          _
      $region82: #{tpu_custom_call.1} parent=5 // pred_fallthru
        _
      %p750 = scmp.le.s32.totalorder 2, %s18
      // Predicated region
      $region91: #{tpu_custom_call.1} parent=5 // pred_check
        %p751 = pneg %p750
      $region92: #{tpu_custom_call.1} parent=5 // pred_check_branch
        %753 = sbr.rel (%p751) target = $region94
      $region93: #{tpu_custom_call.1} parent=5 // pred_region
        %s754 = ssub.s32 %s18, 2
        // Predicated region
        $region95: #{tpu_custom_call.1} parent=93 // pred_check
          %p755 = pneg %p199
        $region96: #{tpu_custom_call.1} parent=93 // pred_check_branch
          %757 = sbr.rel (%p755) target = $region98
        $region97: #{tpu_custom_call.1} parent=93 // pred_region
          %s758 = sand.u32 %s184, 1
          %s759 = scalar_lea.sflag [#allocation5], %s758
          %s760 = sand.u32 %s184, 1
          %s761 = scalar_lea.vmem [#allocation4], %s760
          %762 = dma.done %s759, 16
        $region98: #{tpu_custom_call.1} parent=93 // pred_fallthru
          _
      $region94: #{tpu_custom_call.1} parent=5 // pred_fallthru
        _
    $region6: #{tpu_custom_call.1} parent=1 // loop_footer
      %s22 = sadd.s32 1, %s18
    $region7: #{tpu_custom_call.1} parent=1 // loop_footer_branch
      %17 = sbr.rel target = $region3
    $region8: #{tpu_custom_call.1} parent=1 // loop_exit
      _
    %763 = vsyncpa [#allocation5], 1
    %s764 = scalar_lea.sflag [#allocation5], 1
    %765 = vsyncpa %s764, 1

</llo_original>
